<compile_context>
chip_gen: v6e
topology: v6e:2x2x1
jax: 0.10.0
libtpu: 0.0.40
codegen_flags: <defaults>
</compile_context>

<pallas_src>
import math

import jax
import jax.numpy as jnp
from jax.experimental import pallas as pl
from jax.experimental.pallas import tpu as pltpu


def _expand_kernel(x_ref, o_ref):
    # x_ref: (1, rest) source row; o_ref: (TB, rest) lane-dense output tile.
    # Sublane broadcast + full-width store; dtypes already match (no astype).
    o_ref[...] = jnp.broadcast_to(x_ref[...], o_ref.shape)


_TARGET_BLOCK_BYTES = 1 << 20      # ~1 MiB output blocks
_MIN_PALLAS_OUT_BYTES = 1 << 20    # below this, fused jnp.broadcast_to wins
_MAX_ROW_BYTES = 8 << 20           # a single (1, rest) row must fit VMEM easily


def _resolve_expand_shape(x_shape, shape):
    """torch.Tensor.expand semantics: -1 keeps size, size-1 dims may expand,
    extra leading dims may be added (and may not be -1)."""
    shape = tuple(int(s) for s in shape)
    n_new = len(shape) - len(x_shape)
    if n_new < 0:
        raise ValueError("expand shape must have at least x.ndim dims")
    x_al_shape = (1,) * n_new + tuple(x_shape)
    out_shape = []
    for d, (xs, ts) in enumerate(zip(x_al_shape, shape)):
        if ts == -1:
            if d < n_new:
                raise ValueError("-1 not allowed for newly added leading dims")
            out_shape.append(xs)
        else:
            if xs != 1 and xs != ts:
                raise ValueError(f"cannot expand dim of size {xs} to {ts}")
            out_shape.append(ts)
    return x_al_shape, tuple(out_shape)


def pallas_expand(x, shape, *, min_out_bytes=_MIN_PALLAS_OUT_BYTES):
    x_al_shape, out_shape = _resolve_expand_shape(x.shape, shape)
    x_al = jnp.reshape(x, x_al_shape)
    if x_al_shape == out_shape:          # nothing to broadcast
        return x_al

    dtype_size = jnp.dtype(x.dtype).itemsize
    out_bytes = math.prod(out_shape) * dtype_size

    # Longest non-broadcast trailing suffix -> the lane-dense `rest` group.
    ndim = len(out_shape)
    k = ndim
    while k > 0 and x_al_shape[k - 1] == out_shape[k - 1]:
        k -= 1
    lead_is_pure_broadcast = all(s == 1 for s in x_al_shape[:k])
    rest = math.prod(out_shape[k:])
    lead = math.prod(out_shape[:k])
    row_bytes = rest * dtype_size

    use_pallas = (
        lead_is_pure_broadcast
        and out_bytes >= min_out_bytes
        and row_bytes <= _MAX_ROW_BYTES
    )
    if not use_pallas:
        # Tiny outputs or interleaved broadcast patterns: XLA's fused
        # broadcast is strictly better than a Pallas launch.
        # TODO(synk): Pallas path for interleaved (non-collapsible) broadcast
        # dims; falls back to jnp.broadcast_to (numerically identical).
        return jnp.broadcast_to(x_al, out_shape)

    # Collapse to lane-dense 2-D: (1, rest) -> (lead, rest).
    x2 = jnp.reshape(x_al, (1, rest))

    # Rows per output block: ~1 MiB, rounded to a multiple of 8 sublanes
    # (or the full leading extent if it is small).
    tb = max(1, _TARGET_BLOCK_BYTES // row_bytes)
    if tb >= lead:
        tb = lead
    else:
        tb = max(8, (tb // 8) * 8)
        tb = min(tb, lead)
    grid = (pl.cdiv(lead, tb),)

    cost = pl.CostEstimate(
        flops=0,
        transcendentals=0,
        bytes_accessed=int(x2.size * dtype_size + out_bytes),
    )

    out2 = pl.pallas_call(
        _expand_kernel,
        out_shape=jax.ShapeDtypeStruct((lead, rest), x.dtype),
        grid=grid,
        # Source block index pinned to 0: fetched once, never re-DMA'd.
        in_specs=[pl.BlockSpec((1, rest), lambda i: (0, 0))],
        # Lane-dense output tile, one big contiguous store per grid step.
        out_specs=pl.BlockSpec((tb, rest), lambda i: (i, 0)),
        compiler_params=pltpu.CompilerParams(
            dimension_semantics=("parallel",)),
        cost_estimate=cost,
    )(x2)
    return jnp.reshape(out2, out_shape)


if __name__ == "__main__":
    key = jax.random.PRNGKey(0)

    # 1) Pallas path: lane-dense, MiB-scale expand.
    #    (1, 4, 16, 32) -> (512, 4, 16, 32); rest = 4*16*32 = 2048 lanes
    #    (multiple of 128), 4 MiB output, grid of 4 steps x 1 MiB blocks.
    x_big = jax.random.normal(key, (1, 4, 16, 32), dtype=jnp.float32)
    big_shape = (512, 4, 16, 32)
    out_big = jax.block_until_ready(pallas_expand(x_big, big_shape))
    ref_big = jnp.broadcast_to(x_big, big_shape)
    assert out_big.shape == big_shape and out_big.dtype == x_big.dtype
    assert bool(jnp.all(out_big == ref_big))

    # 2) Exact module spec: x = randn(1, 2, 3, 4) expanded to (2, 2, 3, 4).
    #    (a) default path -> tiny-output fallback (fused broadcast_to)
    #    (b) forced Pallas path to validate kernel semantics on the spec shape
    x_small = jax.random.normal(jax.random.PRNGKey(0), (1, 2, 3, 4),
                                dtype=jnp.float32)
    tgt = (2, 2, 3, 4)
    ref_small = jnp.broadcast_to(x_small, tgt)
    out_fallback = jax.block_until_ready(pallas_expand(x_small, tgt))
    out_forced = jax.block_until_ready(
        pallas_expand(x_small, tgt, min_out_bytes=0))
    for o in (out_fallback, out_forced):
        assert o.shape == tgt and o.dtype == x_small.dtype
        assert bool(jnp.all(o == ref_small))

    print("KERNEL_OK")
</pallas_src>

<mosaic_0001>
module attributes {stable_mosaic.version = 11 : i64} {
  func.func @_expand_kernel(%arg0: i32, %arg1: memref<1x2048xf32, #tpu.memory_space<vmem>>, %arg2: memref<128x2048xf32, #tpu.memory_space<vmem>>) attributes {dimension_semantics = [#tpu.dimension_semantics<parallel>], iteration_bounds = array<i64: 4>, scalar_prefetch = 0 : i64, scratch_operands = 0 : i64, tpu.core_type = #tpu.core_type<tc>, window_params = [{pipeline_mode = #tpu.pipeline_mode<synchronous>, transform_indices = @transform_0, window_bounds = array<i64: 1, 2048>}, {transform_indices = @transform_1, window_bounds = array<i64: 128, 2048>}]} {
    %c0 = arith.constant 0 : index
    %c0_0 = arith.constant 0 : index
    %0 = vector.load %arg1[%c0, %c0_0] : memref<1x2048xf32, #tpu.memory_space<vmem>>, vector<1x2048xf32>
    %1 = vector.shape_cast %0 : vector<1x2048xf32> to vector<1x2048xf32>
    %2 = vector.broadcast %1 : vector<1x2048xf32> to vector<128x2048xf32>
    %c0_1 = arith.constant 0 : index
    %c0_2 = arith.constant 0 : index
    %3 = vector.load %arg2[%c0_1, %c0_2] : memref<128x2048xf32, #tpu.memory_space<vmem>>, vector<128x2048xf32>
    tpu.vector_store %arg2[%c0_1, %c0_2], %2 {strides = array<i32>} : memref<128x2048xf32, #tpu.memory_space<vmem>>, vector<128x2048xf32>,
    return
  }
  func.func @transform_0(%arg0: i32) -> (i32, i32) {
    %c0_i32 = arith.constant 0 : i32
    %c0_i32_0 = arith.constant 0 : i32
    %c0_i32_1 = arith.constant 0 : i32
    return %c0_i32, %c0_i32_0 : i32, i32
  }
  func.func @transform_1(%arg0: i32) -> (i32, i32) {
    %c0_i32 = arith.constant 0 : i32
    %c0_i32_0 = arith.constant 0 : i32
    return %arg0, %c0_i32 : i32, i32
  }
}

</mosaic_0001>

<llo_original>
// kernel: tpu_custom_call.1
$region0: #{tpu_custom_call.1}
  #allocation0 [shape = 'u32[]', space=smem, size = 0x4, offset = 0x4, fixed_abs, tag = 'smem constant byte address 0x4 - core index']
  #allocation1 [shape = 'u32[144,128]{1,0:T(1,128)}', space=vmem, size = 0x12000, scoped, tag = 'internal scratch']
  %s0 = inlined_call_operand.hbm [shape: f32[1,2048], index: 0, kind: input, shape index: {}]
  %s1 = inlined_call_operand.hbm [shape: f32[512,2048], index: 1, kind: output, shape index: {}]
  %s2 = sld [smem:[#allocation0]]
  $region41: #{tpu_custom_call.1} parent=0
    _
  %s4 = ssub.s32 1, %s2
  %s5 = scalar_select 0, %s4, %s2
  $region1: #{tpu_custom_call.1} parent=0
    #allocation2 [shape = 'u8[8192]{0}', space=vmem, size = 0x2000, scoped, tag = 'input window, operand 0, single buffered']
    #allocation3 [shape = 's32[2]{0}', space=sflag, size = 0x8, scoped, tag = 'scoped memory for tpu_custom_call.1']
    #allocation4 [shape = 's32[2]{0}', space=sflag, size = 0x8, scoped, tag = 'scoped memory for tpu_custom_call.1']
    #allocation5 [shape = 'u8[2097152]{0}', space=vmem, size = 0x200000, scoped, tag = 'output window, operand 0']
    %6 = vsyncpa [#allocation3], 0
    %7 = vsyncpa [#allocation4], 0
    %s8 = scalar_lea.sflag [#allocation4], 1
    %9 = vsyncpa %s8, 0
    loop: start=0, step=1, limit=6
    $region2: #{tpu_custom_call.1} parent=1 // loop_pre_header
      _
    $region3: #{tpu_custom_call.1} parent=1 // loop_header
      %s11 = sphi 0, %s15
      %p12 = scmp.ge.s32.totalorder %s11, 6
      %s19 = sphi 0, %s19
      %s21 = sphi 0, %s19
      %s22 = sphi 0, %s21
      %s36 = sphi 0, %s22
      %s42 = sphi 0, %s44
      %s45 = sphi 0, %s42
      %s46 = sphi 0, %s45
      %s62 = sphi 0, %s46
    $region4: #{tpu_custom_call.1} parent=1 // loop_header_branch
      %14 = sbr.rel (%p12) target = $region8
    $region5: #{tpu_custom_call.1} parent=1 // loop_body
      %s16 = ssub.s32 %s11, 1
      %s17 = ssub.s32 %s11, 2
      %s18 = sadd.s32 %s11, 1
      %s20 = sadd.s32 %s19, 1
      %p23 = scmp.eq.s32.totalorder %s11, 3
      %p24 = scmp.ne.s32.totalorder %s19, %s21
      %p25 = scmp.eq.s32.totalorder %s11, 0
      %p26 = por %p24, %p25
      %p27 = scmp.ne.s32.totalorder %s19, %s21
      %p28 = scmp.eq.s32.totalorder %s16, 3
      %p29 = por %p27, %p28
      %p30 = scmp.ne.s32.totalorder %s21, %s22
      %p31 = scmp.eq.s32.totalorder %s16, 0
      %p32 = por %p30, %p31
      %p33 = scmp.ne.s32.totalorder %s21, %s22
      %p34 = scmp.eq.s32.totalorder %s17, 3
      %p35 = por %p33, %p34
      %p37 = scmp.ne.s32.totalorder %s22, %s36
      %p38 = scmp.eq.s32.totalorder %s17, 0
      %p39 = por %p37, %p38
      %s40 = ssub.s32 %s11, %s18
      %p41 = scmp.eq.s32.totalorder %s40, 0
      %s43 = sadd.s32 %s42, 1
      %s44 = scalar_select %p41, %s42, %s43
      %p47 = pneg %p41
      %p48 = scmp.eq.s32.totalorder %s11, 3
      %p49 = por %p47, %p48
      %p50 = scmp.ne.s32.totalorder %s42, %s45
      %p51 = scmp.eq.s32.totalorder %s11, 0
      %p52 = por %p50, %p51
      %p53 = scmp.ne.s32.totalorder %s42, %s45
      %p54 = scmp.eq.s32.totalorder %s16, 3
      %p55 = por %p53, %p54
      %p56 = scmp.ne.s32.totalorder %s45, %s46
      %p57 = scmp.eq.s32.totalorder %s16, 0
      %p58 = por %p56, %p57
      %p59 = scmp.ne.s32.totalorder %s45, %s46
      %p60 = scmp.eq.s32.totalorder %s17, 3
      %p61 = por %p59, %p60
      %p63 = scmp.ne.s32.totalorder %s46, %s62
      %p64 = scmp.eq.s32.totalorder %s17, 0
      %p65 = por %p63, %p64
      %p66 = scmp.le.s32.totalorder 1, %s11
      %p67 = scmp.lt.s32.totalorder %s11, 5
      %p68 = pnand %p66, %p67
      %p69 = pneg %p68
      // Predicated region
      $region9: #{tpu_custom_call.1} parent=5 // pred_check
        _
      $region10: #{tpu_custom_call.1} parent=5 // pred_check_branch
        %71 = sbr.rel (%p68) target = $region12
      $region11: #{tpu_custom_call.1} parent=5 // pred_region
        %s72 = ssub.s32 %s11, 1
        // Predicated region
        $region13: #{tpu_custom_call.1} parent=11 // pred_check
          %p73 = pneg %p32
        $region14: #{tpu_custom_call.1} parent=11 // pred_check_branch
          %75 = sbr.rel (%p73) target = $region16
        $region15: #{tpu_custom_call.1} parent=11 // pred_region
          %s77 = ssub.s32 256, 256
          %78 = vsyncadd [#allocation3], %s77
          %s80 = sshll.u32 [#allocation2], 4
          %s81 = int_to_ptr.vmem [resolvable:$true] %s80
          %83 = dma.hbm_to_vmem [thread:$0]  %s0, 256, %s81, [#allocation3]
        $region16: #{tpu_custom_call.1} parent=11 // pred_fallthru
          _
      $region12: #{tpu_custom_call.1} parent=5 // pred_fallthru
        _
      %p84 = scmp.lt.s32.totalorder %s11, 4
      // Predicated region
      $region17: #{tpu_custom_call.1} parent=5 // pred_check
        %p85 = pneg %p84
      $region18: #{tpu_custom_call.1} parent=5 // pred_check_branch
        %87 = sbr.rel (%p85) target = $region20
      $region19: #{tpu_custom_call.1} parent=5 // pred_region
        _
      $region20: #{tpu_custom_call.1} parent=5 // pred_fallthru
        _
      %p88 = scmp.le.s32.totalorder 1, %s11
      %p89 = scmp.lt.s32.totalorder %s11, 5
      %p90 = pnand %p88, %p89
      %p91 = pneg %p90
      // Predicated region
      $region21: #{tpu_custom_call.1} parent=5 // pred_check
        _
      $region22: #{tpu_custom_call.1} parent=5 // pred_check_branch
        %93 = sbr.rel (%p90) target = $region24
      $region23: #{tpu_custom_call.1} parent=5 // pred_region
        %s94 = ssub.s32 %s11, 1
        // Predicated region
        $region25: #{tpu_custom_call.1} parent=23 // pred_check
          %p95 = pneg %p32
        $region26: #{tpu_custom_call.1} parent=23 // pred_check_branch
          %97 = sbr.rel (%p95) target = $region28
        $region27: #{tpu_custom_call.1} parent=23 // pred_region
          %98 = dma.done [#allocation3], 256
        $region28: #{tpu_custom_call.1} parent=23 // pred_fallthru
          _
        %p99 = pneg %p32
        %p100 = pneg %p29
        %p101 = pneg %p58
        %p102 = pneg %p55
        %s103 = sand.u32 %s45, 1
        %s104 = scalar_lea.sflag [#allocation4], %s103
        %s105 = sand.u32 %s45, 1
        %s106 = smul.addr %s105, 2048
        %s107 = scalar_lea.vmem [#allocation5], %s106
        %s108 = smul.u32 16, %s16
        %v109 = vld [vmem:[#allocation2] sm:$0xff]
        %v110 = vld [vmem:[#allocation2 + $0x8] sm:$0xff]
        %v113 = vlaneseq
        %v114 = vshrl.u32 %v113, 7
        %v115 = vsub.s32 0, %v114
        %v116 = vrot.slane %v109, %v115
        %v117 = vlaneseq
        %v118 = vshrl.u32 %v117, 7
        %v119 = vsub.s32 1, %v118
        %v120 = vrot.slane %v109, %v119
        %v121 = vlaneseq
        %v122 = vshrl.u32 %v121, 7
        %v123 = vsub.s32 2, %v122
        %v124 = vrot.slane %v109, %v123
        %v125 = vlaneseq
        %v126 = vshrl.u32 %v125, 7
        %v127 = vsub.s32 3, %v126
        %v128 = vrot.slane %v109, %v127
        %v129 = vlaneseq
        %v130 = vshrl.u32 %v129, 7
        %v131 = vsub.s32 4, %v130
        %v132 = vrot.slane %v109, %v131
        %v133 = vlaneseq
        %v134 = vshrl.u32 %v133, 7
        %v135 = vsub.s32 5, %v134
        %v136 = vrot.slane %v109, %v135
        %v137 = vlaneseq
        %v138 = vshrl.u32 %v137, 7
        %v139 = vsub.s32 6, %v138
        %v140 = vrot.slane %v109, %v139
        %v141 = vlaneseq
        %v142 = vshrl.u32 %v141, 7
        %v143 = vsub.s32 7, %v142
        %v144 = vrot.slane %v109, %v143
        %v145 = vlaneseq
        %v146 = vshrl.u32 %v145, 7
        %v147 = vsub.s32 0, %v146
        %v148 = vrot.slane %v110, %v147
        %v149 = vlaneseq
        %v150 = vshrl.u32 %v149, 7
        %v151 = vsub.s32 1, %v150
        %v152 = vrot.slane %v110, %v151
        %v153 = vlaneseq
        %v154 = vshrl.u32 %v153, 7
        %v155 = vsub.s32 2, %v154
        %v156 = vrot.slane %v110, %v155
        %v157 = vlaneseq
        %v158 = vshrl.u32 %v157, 7
        %v159 = vsub.s32 3, %v158
        %v160 = vrot.slane %v110, %v159
        %v161 = vlaneseq
        %v162 = vshrl.u32 %v161, 7
        %v163 = vsub.s32 4, %v162
        %v164 = vrot.slane %v110, %v163
        %v165 = vlaneseq
        %v166 = vshrl.u32 %v165, 7
        %v167 = vsub.s32 5, %v166
        %v168 = vrot.slane %v110, %v167
        %v169 = vlaneseq
        %v170 = vshrl.u32 %v169, 7
        %v171 = vsub.s32 6, %v170
        %v172 = vrot.slane %v110, %v171
        %v173 = vlaneseq
        %v174 = vshrl.u32 %v173, 7
        %v175 = vsub.s32 7, %v174
        %v176 = vrot.slane %v110, %v175
        %193 = vst [vmem:[%s107] sm:$0xff] %v116
        %194 = vst [vmem:[%s107 + $0x8] sm:$0xff] %v120
        %195 = vst [vmem:[%s107 + $0x10] sm:$0xff] %v124
        %196 = vst [vmem:[%s107 + $0x18] sm:$0xff] %v128
        %197 = vst [vmem:[%s107 + $0x20] sm:$0xff] %v132
        %198 = vst [vmem:[%s107 + $0x28] sm:$0xff] %v136
        %199 = vst [vmem:[%s107 + $0x30] sm:$0xff] %v140
        %200 = vst [vmem:[%s107 + $0x38] sm:$0xff] %v144
        %201 = vst [vmem:[%s107 + $0x40] sm:$0xff] %v148
        %202 = vst [vmem:[%s107 + $0x48] sm:$0xff] %v152
        %203 = vst [vmem:[%s107 + $0x50] sm:$0xff] %v156
        %204 = vst [vmem:[%s107 + $0x58] sm:$0xff] %v160
        %205 = vst [vmem:[%s107 + $0x60] sm:$0xff] %v164
        %206 = vst [vmem:[%s107 + $0x68] sm:$0xff] %v168
        %207 = vst [vmem:[%s107 + $0x70] sm:$0xff] %v172
        %208 = vst [vmem:[%s107 + $0x78] sm:$0xff] %v176
        %209 = vst [vmem:[%s107 + $0x80] sm:$0xff] %v116
        %210 = vst [vmem:[%s107 + $0x88] sm:$0xff] %v120
        %211 = vst [vmem:[%s107 + $0x90] sm:$0xff] %v124
        %212 = vst [vmem:[%s107 + $0x98] sm:$0xff] %v128
        %213 = vst [vmem:[%s107 + $0xa0] sm:$0xff] %v132
        %214 = vst [vmem:[%s107 + $0xa8] sm:$0xff] %v136
        %215 = vst [vmem:[%s107 + $0xb0] sm:$0xff] %v140
        %216 = vst [vmem:[%s107 + $0xb8] sm:$0xff] %v144
        %217 = vst [vmem:[%s107 + $0xc0] sm:$0xff] %v148
        %218 = vst [vmem:[%s107 + $0xc8] sm:$0xff] %v152
        %219 = vst [vmem:[%s107 + $0xd0] sm:$0xff] %v156
        %220 = vst [vmem:[%s107 + $0xd8] sm:$0xff] %v160
        %221 = vst [vmem:[%s107 + $0xe0] sm:$0xff] %v164
        %222 = vst [vmem:[%s107 + $0xe8] sm:$0xff] %v168
        %223 = vst [vmem:[%s107 + $0xf0] sm:$0xff] %v172
        %224 = vst [vmem:[%s107 + $0xf8] sm:$0xff] %v176
        %225 = vst [vmem:[%s107 + $0x100] sm:$0xff] %v116
        %226 = vst [vmem:[%s107 + $0x108] sm:$0xff] %v120
        %227 = vst [vmem:[%s107 + $0x110] sm:$0xff] %v124
        %228 = vst [vmem:[%s107 + $0x118] sm:$0xff] %v128
        %229 = vst [vmem:[%s107 + $0x120] sm:$0xff] %v132
        %230 = vst [vmem:[%s107 + $0x128] sm:$0xff] %v136
        %231 = vst [vmem:[%s107 + $0x130] sm:$0xff] %v140
        %232 = vst [vmem:[%s107 + $0x138] sm:$0xff] %v144
        %233 = vst [vmem:[%s107 + $0x140] sm:$0xff] %v148
        %234 = vst [vmem:[%s107 + $0x148] sm:$0xff] %v152
        %235 = vst [vmem:[%s107 + $0x150] sm:$0xff] %v156
        %236 = vst [vmem:[%s107 + $0x158] sm:$0xff] %v160
        %237 = vst [vmem:[%s107 + $0x160] sm:$0xff] %v164
        %238 = vst [vmem:[%s107 + $0x168] sm:$0xff] %v168
        %239 = vst [vmem:[%s107 + $0x170] sm:$0xff] %v172
        %240 = vst [vmem:[%s107 + $0x178] sm:$0xff] %v176
        %241 = vst [vmem:[%s107 + $0x180] sm:$0xff] %v116
        %242 = vst [vmem:[%s107 + $0x188] sm:$0xff] %v120
        %243 = vst [vmem:[%s107 + $0x190] sm:$0xff] %v124
        %244 = vst [vmem:[%s107 + $0x198] sm:$0xff] %v128
        %245 = vst [vmem:[%s107 + $0x1a0] sm:$0xff] %v132
        %246 = vst [vmem:[%s107 + $0x1a8] sm:$0xff] %v136
        %247 = vst [vmem:[%s107 + $0x1b0] sm:$0xff] %v140
        %248 = vst [vmem:[%s107 + $0x1b8] sm:$0xff] %v144
        %249 = vst [vmem:[%s107 + $0x1c0] sm:$0xff] %v148
        %250 = vst [vmem:[%s107 + $0x1c8] sm:$0xff] %v152
        %251 = vst [vmem:[%s107 + $0x1d0] sm:$0xff] %v156
        %252 = vst [vmem:[%s107 + $0x1d8] sm:$0xff] %v160
        %253 = vst [vmem:[%s107 + $0x1e0] sm:$0xff] %v164
        %254 = vst [vmem:[%s107 + $0x1e8] sm:$0xff] %v168
        %255 = vst [vmem:[%s107 + $0x1f0] sm:$0xff] %v172
        %256 = vst [vmem:[%s107 + $0x1f8] sm:$0xff] %v176
        %257 = vst [vmem:[%s107 + $0x200] sm:$0xff] %v116
        %258 = vst [vmem:[%s107 + $0x208] sm:$0xff] %v120
        %259 = vst [vmem:[%s107 + $0x210] sm:$0xff] %v124
        %260 = vst [vmem:[%s107 + $0x218] sm:$0xff] %v128
        %261 = vst [vmem:[%s107 + $0x220] sm:$0xff] %v132
        %262 = vst [vmem:[%s107 + $0x228] sm:$0xff] %v136
        %263 = vst [vmem:[%s107 + $0x230] sm:$0xff] %v140
        %264 = vst [vmem:[%s107 + $0x238] sm:$0xff] %v144
        %265 = vst [vmem:[%s107 + $0x240] sm:$0xff] %v148
        %266 = vst [vmem:[%s107 + $0x248] sm:$0xff] %v152
        %267 = vst [vmem:[%s107 + $0x250] sm:$0xff] %v156
        %268 = vst [vmem:[%s107 + $0x258] sm:$0xff] %v160
        %269 = vst [vmem:[%s107 + $0x260] sm:$0xff] %v164
        %270 = vst [vmem:[%s107 + $0x268] sm:$0xff] %v168
        %271 = vst [vmem:[%s107 + $0x270] sm:$0xff] %v172
        %272 = vst [vmem:[%s107 + $0x278] sm:$0xff] %v176
        %273 = vst [vmem:[%s107 + $0x280] sm:$0xff] %v116
        %274 = vst [vmem:[%s107 + $0x288] sm:$0xff] %v120
        %275 = vst [vmem:[%s107 + $0x290] sm:$0xff] %v124
        %276 = vst [vmem:[%s107 + $0x298] sm:$0xff] %v128
        %277 = vst [vmem:[%s107 + $0x2a0] sm:$0xff] %v132
        %278 = vst [vmem:[%s107 + $0x2a8] sm:$0xff] %v136
        %279 = vst [vmem:[%s107 + $0x2b0] sm:$0xff] %v140
        %280 = vst [vmem:[%s107 + $0x2b8] sm:$0xff] %v144
        %281 = vst [vmem:[%s107 + $0x2c0] sm:$0xff] %v148
        %282 = vst [vmem:[%s107 + $0x2c8] sm:$0xff] %v152
        %283 = vst [vmem:[%s107 + $0x2d0] sm:$0xff] %v156
        %284 = vst [vmem:[%s107 + $0x2d8] sm:$0xff] %v160
        %285 = vst [vmem:[%s107 + $0x2e0] sm:$0xff] %v164
        %286 = vst [vmem:[%s107 + $0x2e8] sm:$0xff] %v168
        %287 = vst [vmem:[%s107 + $0x2f0] sm:$0xff] %v172
        %288 = vst [vmem:[%s107 + $0x2f8] sm:$0xff] %v176
        %289 = vst [vmem:[%s107 + $0x300] sm:$0xff] %v116
        %290 = vst [vmem:[%s107 + $0x308] sm:$0xff] %v120
        %291 = vst [vmem:[%s107 + $0x310] sm:$0xff] %v124
        %292 = vst [vmem:[%s107 + $0x318] sm:$0xff] %v128
        %293 = vst [vmem:[%s107 + $0x320] sm:$0xff] %v132
        %294 = vst [vmem:[%s107 + $0x328] sm:$0xff] %v136
        %295 = vst [vmem:[%s107 + $0x330] sm:$0xff] %v140
        %296 = vst [vmem:[%s107 + $0x338] sm:$0xff] %v144
        %297 = vst [vmem:[%s107 + $0x340] sm:$0xff] %v148
        %298 = vst [vmem:[%s107 + $0x348] sm:$0xff] %v152
        %299 = vst [vmem:[%s107 + $0x350] sm:$0xff] %v156
        %300 = vst [vmem:[%s107 + $0x358] sm:$0xff] %v160
        %301 = vst [vmem:[%s107 + $0x360] sm:$0xff] %v164
        %302 = vst [vmem:[%s107 + $0x368] sm:$0xff] %v168
        %303 = vst [vmem:[%s107 + $0x370] sm:$0xff] %v172
        %304 = vst [vmem:[%s107 + $0x378] sm:$0xff] %v176
        %305 = vst [vmem:[%s107 + $0x380] sm:$0xff] %v116
        %306 = vst [vmem:[%s107 + $0x388] sm:$0xff] %v120
        %307 = vst [vmem:[%s107 + $0x390] sm:$0xff] %v124
        %308 = vst [vmem:[%s107 + $0x398] sm:$0xff] %v128
        %309 = vst [vmem:[%s107 + $0x3a0] sm:$0xff] %v132
        %310 = vst [vmem:[%s107 + $0x3a8] sm:$0xff] %v136
        %311 = vst [vmem:[%s107 + $0x3b0] sm:$0xff] %v140
        %312 = vst [vmem:[%s107 + $0x3b8] sm:$0xff] %v144
        %313 = vst [vmem:[%s107 + $0x3c0] sm:$0xff] %v148
        %314 = vst [vmem:[%s107 + $0x3c8] sm:$0xff] %v152
        %315 = vst [vmem:[%s107 + $0x3d0] sm:$0xff] %v156
        %316 = vst [vmem:[%s107 + $0x3d8] sm:$0xff] %v160
        %317 = vst [vmem:[%s107 + $0x3e0] sm:$0xff] %v164
        %318 = vst [vmem:[%s107 + $0x3e8] sm:$0xff] %v168
        %319 = vst [vmem:[%s107 + $0x3f0] sm:$0xff] %v172
        %320 = vst [vmem:[%s107 + $0x3f8] sm:$0xff] %v176
        %321 = vst [vmem:[%s107 + $0x400] sm:$0xff] %v116
        %322 = vst [vmem:[%s107 + $0x408] sm:$0xff] %v120
        %323 = vst [vmem:[%s107 + $0x410] sm:$0xff] %v124
        %324 = vst [vmem:[%s107 + $0x418] sm:$0xff] %v128
        %325 = vst [vmem:[%s107 + $0x420] sm:$0xff] %v132
        %326 = vst [vmem:[%s107 + $0x428] sm:$0xff] %v136
        %327 = vst [vmem:[%s107 + $0x430] sm:$0xff] %v140
        %328 = vst [vmem:[%s107 + $0x438] sm:$0xff] %v144
        %329 = vst [vmem:[%s107 + $0x440] sm:$0xff] %v148
        %330 = vst [vmem:[%s107 + $0x448] sm:$0xff] %v152
        %331 = vst [vmem:[%s107 + $0x450] sm:$0xff] %v156
        %332 = vst [vmem:[%s107 + $0x458] sm:$0xff] %v160
        %333 = vst [vmem:[%s107 + $0x460] sm:$0xff] %v164
        %334 = vst [vmem:[%s107 + $0x468] sm:$0xff] %v168
        %335 = vst [vmem:[%s107 + $0x470] sm:$0xff] %v172
        %336 = vst [vmem:[%s107 + $0x478] sm:$0xff] %v176
        %337 = vst [vmem:[%s107 + $0x480] sm:$0xff] %v116
        %338 = vst [vmem:[%s107 + $0x488] sm:$0xff] %v120
        %339 = vst [vmem:[%s107 + $0x490] sm:$0xff] %v124
        %340 = vst [vmem:[%s107 + $0x498] sm:$0xff] %v128
        %341 = vst [vmem:[%s107 + $0x4a0] sm:$0xff] %v132
        %342 = vst [vmem:[%s107 + $0x4a8] sm:$0xff] %v136
        %343 = vst [vmem:[%s107 + $0x4b0] sm:$0xff] %v140
        %344 = vst [vmem:[%s107 + $0x4b8] sm:$0xff] %v144
        %345 = vst [vmem:[%s107 + $0x4c0] sm:$0xff] %v148
        %346 = vst [vmem:[%s107 + $0x4c8] sm:$0xff] %v152
        %347 = vst [vmem:[%s107 + $0x4d0] sm:$0xff] %v156
        %348 = vst [vmem:[%s107 + $0x4d8] sm:$0xff] %v160
        %349 = vst [vmem:[%s107 + $0x4e0] sm:$0xff] %v164
        %350 = vst [vmem:[%s107 + $0x4e8] sm:$0xff] %v168
        %351 = vst [vmem:[%s107 + $0x4f0] sm:$0xff] %v172
        %352 = vst [vmem:[%s107 + $0x4f8] sm:$0xff] %v176
        %353 = vst [vmem:[%s107 + $0x500] sm:$0xff] %v116
        %354 = vst [vmem:[%s107 + $0x508] sm:$0xff] %v120
        %355 = vst [vmem:[%s107 + $0x510] sm:$0xff] %v124
        %356 = vst [vmem:[%s107 + $0x518] sm:$0xff] %v128
        %357 = vst [vmem:[%s107 + $0x520] sm:$0xff] %v132
        %358 = vst [vmem:[%s107 + $0x528] sm:$0xff] %v136
        %359 = vst [vmem:[%s107 + $0x530] sm:$0xff] %v140
        %360 = vst [vmem:[%s107 + $0x538] sm:$0xff] %v144
        %361 = vst [vmem:[%s107 + $0x540] sm:$0xff] %v148
        %362 = vst [vmem:[%s107 + $0x548] sm:$0xff] %v152
        %363 = vst [vmem:[%s107 + $0x550] sm:$0xff] %v156
        %364 = vst [vmem:[%s107 + $0x558] sm:$0xff] %v160
        %365 = vst [vmem:[%s107 + $0x560] sm:$0xff] %v164
        %366 = vst [vmem:[%s107 + $0x568] sm:$0xff] %v168
        %367 = vst [vmem:[%s107 + $0x570] sm:$0xff] %v172
        %368 = vst [vmem:[%s107 + $0x578] sm:$0xff] %v176
        %369 = vst [vmem:[%s107 + $0x580] sm:$0xff] %v116
        %370 = vst [vmem:[%s107 + $0x588] sm:$0xff] %v120
        %371 = vst [vmem:[%s107 + $0x590] sm:$0xff] %v124
        %372 = vst [vmem:[%s107 + $0x598] sm:$0xff] %v128
        %373 = vst [vmem:[%s107 + $0x5a0] sm:$0xff] %v132
        %374 = vst [vmem:[%s107 + $0x5a8] sm:$0xff] %v136
        %375 = vst [vmem:[%s107 + $0x5b0] sm:$0xff] %v140
        %376 = vst [vmem:[%s107 + $0x5b8] sm:$0xff] %v144
        %377 = vst [vmem:[%s107 + $0x5c0] sm:$0xff] %v148
        %378 = vst [vmem:[%s107 + $0x5c8] sm:$0xff] %v152
        %379 = vst [vmem:[%s107 + $0x5d0] sm:$0xff] %v156
        %380 = vst [vmem:[%s107 + $0x5d8] sm:$0xff] %v160
        %381 = vst [vmem:[%s107 + $0x5e0] sm:$0xff] %v164
        %382 = vst [vmem:[%s107 + $0x5e8] sm:$0xff] %v168
        %383 = vst [vmem:[%s107 + $0x5f0] sm:$0xff] %v172
        %384 = vst [vmem:[%s107 + $0x5f8] sm:$0xff] %v176
        %385 = vst [vmem:[%s107 + $0x600] sm:$0xff] %v116
        %386 = vst [vmem:[%s107 + $0x608] sm:$0xff] %v120
        %387 = vst [vmem:[%s107 + $0x610] sm:$0xff] %v124
        %388 = vst [vmem:[%s107 + $0x618] sm:$0xff] %v128
        %389 = vst [vmem:[%s107 + $0x620] sm:$0xff] %v132
        %390 = vst [vmem:[%s107 + $0x628] sm:$0xff] %v136
        %391 = vst [vmem:[%s107 + $0x630] sm:$0xff] %v140
        %392 = vst [vmem:[%s107 + $0x638] sm:$0xff] %v144
        %393 = vst [vmem:[%s107 + $0x640] sm:$0xff] %v148
        %394 = vst [vmem:[%s107 + $0x648] sm:$0xff] %v152
        %395 = vst [vmem:[%s107 + $0x650] sm:$0xff] %v156
        %396 = vst [vmem:[%s107 + $0x658] sm:$0xff] %v160
        %397 = vst [vmem:[%s107 + $0x660] sm:$0xff] %v164
        %398 = vst [vmem:[%s107 + $0x668] sm:$0xff] %v168
        %399 = vst [vmem:[%s107 + $0x670] sm:$0xff] %v172
        %400 = vst [vmem:[%s107 + $0x678] sm:$0xff] %v176
        %401 = vst [vmem:[%s107 + $0x680] sm:$0xff] %v116
        %402 = vst [vmem:[%s107 + $0x688] sm:$0xff] %v120
        %403 = vst [vmem:[%s107 + $0x690] sm:$0xff] %v124
        %404 = vst [vmem:[%s107 + $0x698] sm:$0xff] %v128
        %405 = vst [vmem:[%s107 + $0x6a0] sm:$0xff] %v132
        %406 = vst [vmem:[%s107 + $0x6a8] sm:$0xff] %v136
        %407 = vst [vmem:[%s107 + $0x6b0] sm:$0xff] %v140
        %408 = vst [vmem:[%s107 + $0x6b8] sm:$0xff] %v144
        %409 = vst [vmem:[%s107 + $0x6c0] sm:$0xff] %v148
        %410 = vst [vmem:[%s107 + $0x6c8] sm:$0xff] %v152
        %411 = vst [vmem:[%s107 + $0x6d0] sm:$0xff] %v156
        %412 = vst [vmem:[%s107 + $0x6d8] sm:$0xff] %v160
        %413 = vst [vmem:[%s107 + $0x6e0] sm:$0xff] %v164
        %414 = vst [vmem:[%s107 + $0x6e8] sm:$0xff] %v168
        %415 = vst [vmem:[%s107 + $0x6f0] sm:$0xff] %v172
        %416 = vst [vmem:[%s107 + $0x6f8] sm:$0xff] %v176
        %417 = vst [vmem:[%s107 + $0x700] sm:$0xff] %v116
        %418 = vst [vmem:[%s107 + $0x708] sm:$0xff] %v120
        %419 = vst [vmem:[%s107 + $0x710] sm:$0xff] %v124
        %420 = vst [vmem:[%s107 + $0x718] sm:$0xff] %v128
        %421 = vst [vmem:[%s107 + $0x720] sm:$0xff] %v132
        %422 = vst [vmem:[%s107 + $0x728] sm:$0xff] %v136
        %423 = vst [vmem:[%s107 + $0x730] sm:$0xff] %v140
        %424 = vst [vmem:[%s107 + $0x738] sm:$0xff] %v144
        %425 = vst [vmem:[%s107 + $0x740] sm:$0xff] %v148
        %426 = vst [vmem:[%s107 + $0x748] sm:$0xff] %v152
        %427 = vst [vmem:[%s107 + $0x750] sm:$0xff] %v156
        %428 = vst [vmem:[%s107 + $0x758] sm:$0xff] %v160
        %429 = vst [vmem:[%s107 + $0x760] sm:$0xff] %v164
        %430 = vst [vmem:[%s107 + $0x768] sm:$0xff] %v168
        %431 = vst [vmem:[%s107 + $0x770] sm:$0xff] %v172
        %432 = vst [vmem:[%s107 + $0x778] sm:$0xff] %v176
        %433 = vst [vmem:[%s107 + $0x780] sm:$0xff] %v116
        %434 = vst [vmem:[%s107 + $0x788] sm:$0xff] %v120
        %435 = vst [vmem:[%s107 + $0x790] sm:$0xff] %v124
        %436 = vst [vmem:[%s107 + $0x798] sm:$0xff] %v128
        %437 = vst [vmem:[%s107 + $0x7a0] sm:$0xff] %v132
        %438 = vst [vmem:[%s107 + $0x7a8] sm:$0xff] %v136
        %439 = vst [vmem:[%s107 + $0x7b0] sm:$0xff] %v140
        %440 = vst [vmem:[%s107 + $0x7b8] sm:$0xff] %v144
        %441 = vst [vmem:[%s107 + $0x7c0] sm:$0xff] %v148
        %442 = vst [vmem:[%s107 + $0x7c8] sm:$0xff] %v152
        %443 = vst [vmem:[%s107 + $0x7d0] sm:$0xff] %v156
        %444 = vst [vmem:[%s107 + $0x7d8] sm:$0xff] %v160
        %445 = vst [vmem:[%s107 + $0x7e0] sm:$0xff] %v164
        %446 = vst [vmem:[%s107 + $0x7e8] sm:$0xff] %v168
        %447 = vst [vmem:[%s107 + $0x7f0] sm:$0xff] %v172
        %448 = vst [vmem:[%s107 + $0x7f8] sm:$0xff] %v176
        %s449 = sand.u32 %s45, 1
        %s450 = scalar_lea.sflag [#allocation4], %s449
        %s451 = sand.u32 %s45, 1
        %s452 = smul.addr %s451, 2048
        %s453 = scalar_lea.vmem [#allocation5], %s452
        // Predicated region
        $region29: #{tpu_custom_call.1} parent=23 // pred_check
          %p454 = pneg %p55
        $region30: #{tpu_custom_call.1} parent=23 // pred_check_branch
          %456 = sbr.rel (%p454) target = $region32
        $region31: #{tpu_custom_call.1} parent=23 // pred_region
          %s457 = smul.u32 16, %s16
          %s459 = ssub.s32 32768, 32768
          %460 = vsyncadd %s450, %s459
          %s461 = smul.addr %s457, 16
          %s462 = smul.addr %s461, 128
          %s463 = scalar_lea.hbm %s1, %s462
          %s464 = sshll.u32 %s453, 4
          %s465 = int_to_ptr.vmem [resolvable:$true] %s464
          %470 = dma.vmem_to_hbm [thread:$0]  %s465, 32768, %s463, %s450, 2048, 2048, 128
        $region32: #{tpu_custom_call.1} parent=23 // pred_fallthru
          _
      $region24: #{tpu_custom_call.1} parent=5 // pred_fallthru
        _
      %p471 = scmp.le.s32.totalorder 2, %s11
      // Predicated region
      $region33: #{tpu_custom_call.1} parent=5 // pred_check
        %p472 = pneg %p471
      $region34: #{tpu_custom_call.1} parent=5 // pred_check_branch
        %474 = sbr.rel (%p472) target = $region36
      $region35: #{tpu_custom_call.1} parent=5 // pred_region
        %s475 = ssub.s32 %s11, 2
        // Predicated region
        $region37: #{tpu_custom_call.1} parent=35 // pred_check
          %p476 = pneg %p61
        $region38: #{tpu_custom_call.1} parent=35 // pred_check_branch
          %478 = sbr.rel (%p476) target = $region40
        $region39: #{tpu_custom_call.1} parent=35 // pred_region
          %s479 = sand.u32 %s46, 1
          %s480 = scalar_lea.sflag [#allocation4], %s479
          %s481 = sand.u32 %s46, 1
          %s482 = smul.addr %s481, 2048
          %s483 = scalar_lea.vmem [#allocation5], %s482
          %484 = dma.done %s480, 32768
        $region40: #{tpu_custom_call.1} parent=35 // pred_fallthru
          _
      $region36: #{tpu_custom_call.1} parent=5 // pred_fallthru
        _
    $region6: #{tpu_custom_call.1} parent=1 // loop_footer
      %s15 = sadd.s32 1, %s11
    $region7: #{tpu_custom_call.1} parent=1 // loop_footer_branch
      %10 = sbr.rel target = $region3
    $region8: #{tpu_custom_call.1} parent=1 // loop_exit
      _
    %485 = vsyncpa [#allocation3], 1
    %s486 = scalar_lea.sflag [#allocation3], 1
    %487 = vsyncpa %s486, 1
    %488 = vsyncpa [#allocation4], 1
    %s489 = scalar_lea.sflag [#allocation4], 1
    %490 = vsyncpa %s489, 1

</llo_original>
